<compile_context>
chip_gen: v7x
topology: tpu7x:2x2x1
jax: 0.10.0
libtpu: 0.0.40
codegen_flags: <defaults>
</compile_context>

<pallas_src>
import functools

import jax
import jax.numpy as jnp
import numpy as np
from jax.experimental import pallas as pl
from jax.experimental.pallas import tpu as pltpu


def _entity_pool_kernel(ents_ref, pre_ref, post_ref,
                        w_in_ref, b_in_ref, w_out_ref, b_out_ref,
                        out_ref, *, pooling_type):
    # ents_ref : (tb, ne, in_dim)
    # pre_ref  : (tb, n_agents, ne)      float 0/1, nonzero => mask out pre-pool
    # post_ref : (tb*n_agents, 1)        float 0/1, nonzero => zero agent output
    # w_in_ref : (in_dim, embed)   b_in_ref : (1, embed)
    # w_out_ref: (embed, out_dim)  b_out_ref: (1, out_dim)
    # out_ref  : (tb*n_agents, out_dim)
    tb, ne, in_dim = ents_ref.shape
    n_agents = pre_ref.shape[1]
    embed = w_in_ref.shape[1]

    # ---- in_trans: fold all tb*ne rows into a single MXU matmul ----
    ents2d = ents_ref[...].reshape(tb * ne, in_dim)
    et2d = (jnp.dot(ents2d, w_in_ref[...], preferred_element_type=jnp.float32)
            + b_in_ref[...])
    et3 = et2d.reshape(tb, ne, embed)                       # (tb, ne, embed)

    # keep[b, a, e] = 1.0 where the agent-entity pair is visible (mask == 0)
    keep = (pre_ref[...] == 0.0).astype(jnp.float32)        # (tb, n_agents, ne)

    if pooling_type == "mean":
        # masked_fill(0).mean(dim=2) == (keep / ne) @ ents_trans
        # -> reduction runs on the MXU as a batched matmul; 1/ne folds into the
        #    mask matrix for free.
        pooled = jnp.einsum("bae,bef->baf", keep * (1.0 / ne), et3,
                            preferred_element_type=jnp.float32)
    elif pooling_type == "max":
        # masked_fill(0) + max == multiply by keep (implicit broadcast) + max.
        # Only this path materializes a (tb, n_agents, ne, embed) tensor; the
        # wrapper sizes tb so it stays small. For very large n_agents*ne, chunk
        # the agent axis here instead of shrinking tb.
        masked = et3[:, None, :, :] * keep[..., None]       # (tb, n_agents, ne, embed)
        pooled = jnp.max(masked, axis=2)                    # (tb, n_agents, embed)
    else:
        raise ValueError(f"unknown pooling_type: {pooling_type}")

    # ---- out_trans: one matmul over all tb*n_agents pooled rows ----
    pooled2d = pooled.reshape(tb * n_agents, embed)
    out2d = (jnp.dot(pooled2d, w_out_ref[...], preferred_element_type=jnp.float32)
             + b_out_ref[...])                              # (tb*n_agents, out_dim)

    # post mask: zero out unavailable agents
    out2d = jnp.where(post_ref[...] == 0.0, out2d, 0.0)

    out_ref[...] = out2d.astype(out_ref.dtype)


def entity_pooling_forward(entities, pre_mask, post_mask,
                           w_in, b_in, w_out, b_out, *,
                           pooling_type, batch_tile=None):
    """entities: (bs, ne, in_dim); pre_mask: (bs, n_agents_total, ne);
    post_mask: (bs, n_agents).  Returns (bs, n_agents, out_dim)."""
    bs, ne, in_dim = entities.shape
    n_agents = post_mask.shape[1]
    embed = w_in.shape[1]
    out_dim = w_out.shape[1]

    # glue: truncate pre_mask to post_mask's agent count, cast masks to f32
    pre_mask = pre_mask[:, :n_agents].astype(jnp.float32)
    post_mask = post_mask.astype(jnp.float32)

    # ---- choose batch tile TB: fill the MXU / amortize per-step overhead while
    # keeping per-step f32 intermediates well inside every chip's scoped VMEM ----
    if batch_tile is None:
        per_b = (ne * in_dim + ne * embed + n_agents * ne
                 + n_agents * embed + n_agents * out_dim)
        if pooling_type == "max":
            per_b += n_agents * ne * embed      # broadcast-masked tensor (max path)
        budget_bytes = 2 * 1024 * 1024
        batch_tile = max(1, min(512, budget_bytes // (4 * per_b)))
    tb = min(bs, batch_tile)
    if tb < bs:
        # multi-step grid: keep the flattened (tb*n_agents) sublane dim 8-aligned
        tb = max(8, (tb // 8) * 8)
    bs_pad = ((bs + tb - 1) // tb) * tb

    if bs_pad != bs:
        pad = bs_pad - bs
        entities = jnp.pad(entities, ((0, pad), (0, 0), (0, 0)))
        pre_mask = jnp.pad(pre_mask, ((0, pad), (0, 0), (0, 0)), constant_values=1.0)
        post_mask = jnp.pad(post_mask, ((0, pad), (0, 0)), constant_values=1.0)

    post_flat = post_mask.reshape(bs_pad * n_agents, 1)
    b_in2 = b_in.reshape(1, embed)
    b_out2 = b_out.reshape(1, out_dim)

    kernel = functools.partial(_entity_pool_kernel, pooling_type=pooling_type)

    out_flat = pl.pallas_call(
        kernel,
        out_shape=jax.ShapeDtypeStruct((bs_pad * n_agents, out_dim), entities.dtype),
        grid_spec=pltpu.PrefetchScalarGridSpec(
            num_scalar_prefetch=0,
            grid=(bs_pad // tb,),
            in_specs=[
                pl.BlockSpec((tb, ne, in_dim), lambda b: (b, 0, 0)),       # entities
                pl.BlockSpec((tb, n_agents, ne), lambda b: (b, 0, 0)),     # pre_mask
                pl.BlockSpec((tb * n_agents, 1), lambda b: (b, 0)),        # post_mask
                pl.BlockSpec((in_dim, embed), lambda b: (0, 0)),           # W_in (VMEM resident)
                pl.BlockSpec((1, embed), lambda b: (0, 0)),                # b_in
                pl.BlockSpec((embed, out_dim), lambda b: (0, 0)),          # W_out (VMEM resident)
                pl.BlockSpec((1, out_dim), lambda b: (0, 0)),              # b_out
            ],
            out_specs=pl.BlockSpec((tb * n_agents, out_dim), lambda b: (b, 0)),
        ),
        compiler_params=pltpu.CompilerParams(
            dimension_semantics=("parallel",)),   # lets v7x shard batch tiles over 2 TCs
    )(entities, pre_mask, post_flat, w_in, b_in2, w_out, b_out2)

    out = out_flat.reshape(bs_pad, n_agents, out_dim)
    return out[:bs]


def _reference(entities, pre_mask, post_mask, w_in, b_in, w_out, b_out, pooling_type):
    bs, ne, _ = entities.shape
    n_agents = post_mask.shape[1]
    ents_trans = entities @ w_in + b_in                               # (bs, ne, embed)
    rep = jnp.broadcast_to(ents_trans[:, None, :, :],
                           (bs, n_agents, ne, ents_trans.shape[-1]))
    pm = pre_mask[:, :n_agents].astype(bool)[..., None]
    rep = jnp.where(pm, 0.0, rep)
    if pooling_type == "max":
        pooled = rep.max(axis=2)
    else:
        pooled = rep.mean(axis=2)
    out = pooled @ w_out + b_out
    out = jnp.where(post_mask.astype(bool)[..., None], 0.0, out)
    return out


if __name__ == "__main__":
    key = jax.random.PRNGKey(0)
    bs, ne, in_dim = 2, 8, 32
    embed_dim, out_dim = 32, 32      # module's reshape implicitly requires in_dim == embed_dim
    n_agents = 4

    k1, k2, k3, k4, k5, k6, k7 = jax.random.split(key, 7)

    entities = jax.random.normal(k1, (bs, ne, in_dim), jnp.float32)
    pre_mask = (jax.random.uniform(k2, (bs, n_agents, ne)) < 0.3).astype(jnp.float32)
    post_mask = (jax.random.uniform(k3, (bs, n_agents)) < 0.25).astype(jnp.float32)

    # Deterministic nn.Linear-style params
    lim_in = 1.0 / np.sqrt(in_dim)
    lim_out = 1.0 / np.sqrt(embed_dim)
    w_in = jax.random.uniform(k4, (in_dim, embed_dim), jnp.float32, -lim_in, lim_in)
    b_in = jax.random.uniform(k5, (embed_dim,), jnp.float32, -lim_in, lim_in)
    w_out = jax.random.uniform(k6, (embed_dim, out_dim), jnp.float32, -lim_out, lim_out)
    b_out = jax.random.uniform(k7, (out_dim,), jnp.float32, -lim_out, lim_out)

    # single-tile (grid == 1) path, both pooling modes
    for pt in ("max", "mean"):
        out = jax.block_until_ready(
            entity_pooling_forward(entities, pre_mask, post_mask,
                                   w_in, b_in, w_out, b_out, pooling_type=pt))
        ref = _reference(entities, pre_mask, post_mask, w_in, b_in, w_out, b_out, pt)
        np.testing.assert_allclose(np.asarray(out), np.asarray(ref), rtol=1e-5, atol=1e-5)

    # multi-step grid + batch-padding path (bs not a multiple of the tile)
    bs2 = 20
    k8, k9, k10 = jax.random.split(jax.random.PRNGKey(1), 3)
    entities2 = jax.random.normal(k8, (bs2, ne, in_dim), jnp.float32)
    pre_mask2 = (jax.random.uniform(k9, (bs2, n_agents, ne)) < 0.3).astype(jnp.float32)
    post_mask2 = (jax.random.uniform(k10, (bs2, n_agents)) < 0.25).astype(jnp.float32)
    out2 = jax.block_until_ready(
        entity_pooling_forward(entities2, pre_mask2, post_mask2,
                               w_in, b_in, w_out, b_out,
                               pooling_type="max", batch_tile=8))
    ref2 = _reference(entities2, pre_mask2, post_mask2, w_in, b_in, w_out, b_out, "max")
    np.testing.assert_allclose(np.asarray(out2), np.asarray(ref2), rtol=1e-5, atol=1e-5)

    print("KERNEL_OK")
</pallas_src>

<mosaic_0001>
module attributes {stable_mosaic.version = 11 : i64} {
  func.func @_entity_pool_kernel(%arg0: i32, %arg1: memref<2x8x32xf32, #tpu.memory_space<vmem>>, %arg2: memref<2x4x8xf32, #tpu.memory_space<vmem>>, %arg3: memref<8x1xf32, #tpu.memory_space<vmem>>, %arg4: memref<32x32xf32, #tpu.memory_space<vmem>>, %arg5: memref<1x32xf32, #tpu.memory_space<vmem>>, %arg6: memref<32x32xf32, #tpu.memory_space<vmem>>, %arg7: memref<1x32xf32, #tpu.memory_space<vmem>>, %arg8: memref<8x32xf32, #tpu.memory_space<vmem>>) attributes {dimension_semantics = [#tpu.dimension_semantics<parallel>], iteration_bounds = array<i64: 1>, scalar_prefetch = 0 : i64, scratch_operands = 0 : i64, tpu.core_type = #tpu.core_type<tc>, window_params = [{transform_indices = @transform_0, window_bounds = array<i64: 2, 8, 32>}, {transform_indices = @transform_1, window_bounds = array<i64: 2, 4, 8>}, {transform_indices = @transform_2, window_bounds = array<i64: 8, 1>}, {pipeline_mode = #tpu.pipeline_mode<synchronous>, transform_indices = @transform_3, window_bounds = array<i64: 32, 32>}, {pipeline_mode = #tpu.pipeline_mode<synchronous>, transform_indices = @transform_4, window_bounds = array<i64: 1, 32>}, {pipeline_mode = #tpu.pipeline_mode<synchronous>, transform_indices = @transform_5, window_bounds = array<i64: 32, 32>}, {pipeline_mode = #tpu.pipeline_mode<synchronous>, transform_indices = @transform_6, window_bounds = array<i64: 1, 32>}, {transform_indices = @transform_7, window_bounds = array<i64: 8, 32>}]} {
    %c0 = arith.constant 0 : index
    %c0_0 = arith.constant 0 : index
    %c0_1 = arith.constant 0 : index
    %0 = vector.load %arg1[%c0, %c0_0, %c0_1] : memref<2x8x32xf32, #tpu.memory_space<vmem>>, vector<2x8x32xf32>
    %1 = vector.shape_cast %0 : vector<2x8x32xf32> to vector<16x32xf32>
    %c0_2 = arith.constant 0 : index
    %c0_3 = arith.constant 0 : index
    %2 = vector.load %arg4[%c0_2, %c0_3] : memref<32x32xf32, #tpu.memory_space<vmem>>, vector<32x32xf32>
    %cst = arith.constant dense<0.000000e+00> : vector<16x32xf32>
    %3 = tpu.matmul %1, %2, %cst {dimension_numbers = #tpu.dot_dimension_numbers<[1], [0], [0], [1], [0, 0, 1, 1], [], []>} : vector<16x32xf32>, vector<32x32xf32>, vector<16x32xf32> -> vector<16x32xf32>
    %c0_4 = arith.constant 0 : index
    %c0_5 = arith.constant 0 : index
    %4 = vector.load %arg5[%c0_4, %c0_5] : memref<1x32xf32, #tpu.memory_space<vmem>>, vector<1x32xf32>
    %5 = vector.broadcast %4 : vector<1x32xf32> to vector<16x32xf32>
    %6 = arith.addf %3, %5 : vector<16x32xf32>
    %7 = vector.shape_cast %6 : vector<16x32xf32> to vector<2x8x32xf32>
    %c0_6 = arith.constant 0 : index
    %c0_7 = arith.constant 0 : index
    %c0_8 = arith.constant 0 : index
    %8 = vector.load %arg2[%c0_6, %c0_7, %c0_8] : memref<2x4x8xf32, #tpu.memory_space<vmem>>, vector<2x4x8xf32>
    %cst_9 = arith.constant 0.000000e+00 : f32
    %9 = vector.broadcast %cst_9 : f32 to vector<2x4x8xf32>
    %10 = arith.cmpf oeq, %8, %9 : vector<2x4x8xf32>
    %11 = arith.extui %10 : vector<2x4x8xi1> to vector<2x4x8xi32>
    %12 = arith.sitofp %11 : vector<2x4x8xi32> to vector<2x4x8xf32>
    %13 = vector.shape_cast %7 : vector<2x8x32xf32> to vector<2x1x8x32xf32>
    %14 = vector.shape_cast %12 : vector<2x4x8xf32> to vector<2x4x8x1xf32>
    %15 = vector.broadcast %13 : vector<2x1x8x32xf32> to vector<2x4x8x32xf32>
    %16 = vector.broadcast %14 : vector<2x4x8x1xf32> to vector<2x4x8x32xf32>
    %17 = arith.mulf %15, %16 : vector<2x4x8x32xf32>
    %cst_10 = arith.constant dense<0xFF800000> : vector<2x4x32xf32>
    %18 = vector.multi_reduction <maximumf>, %17, %cst_10 [2] : vector<2x4x8x32xf32> to vector<2x4x32xf32>
    %19 = vector.shape_cast %18 : vector<2x4x32xf32> to vector<8x32xf32>
    %c0_11 = arith.constant 0 : index
    %c0_12 = arith.constant 0 : index
    %20 = vector.load %arg6[%c0_11, %c0_12] : memref<32x32xf32, #tpu.memory_space<vmem>>, vector<32x32xf32>
    %cst_13 = arith.constant dense<0.000000e+00> : vector<8x32xf32>
    %21 = tpu.matmul %19, %20, %cst_13 {dimension_numbers = #tpu.dot_dimension_numbers<[1], [0], [0], [1], [0, 0, 1, 1], [], []>} : vector<8x32xf32>, vector<32x32xf32>, vector<8x32xf32> -> vector<8x32xf32>
    %c0_14 = arith.constant 0 : index
    %c0_15 = arith.constant 0 : index
    %22 = vector.load %arg7[%c0_14, %c0_15] : memref<1x32xf32, #tpu.memory_space<vmem>>, vector<1x32xf32>
    %23 = vector.broadcast %22 : vector<1x32xf32> to vector<8x32xf32>
    %24 = arith.addf %21, %23 : vector<8x32xf32>
    %c0_16 = arith.constant 0 : index
    %c0_17 = arith.constant 0 : index
    %25 = vector.load %arg3[%c0_16, %c0_17] : memref<8x1xf32, #tpu.memory_space<vmem>>, vector<8x1xf32>
    %cst_18 = arith.constant 0.000000e+00 : f32
    %26 = vector.broadcast %cst_18 : f32 to vector<8x1xf32>
    %27 = arith.cmpf oeq, %25, %26 : vector<8x1xf32>
    %cst_19 = arith.constant 0.000000e+00 : f32
    %28 = vector.shape_cast %27 : vector<8x1xi1> to vector<8x1xi1>
    %29 = vector.broadcast %28 : vector<8x1xi1> to vector<8x32xi1>
    %30 = vector.broadcast %cst_19 : f32 to vector<8x32xf32>
    %31 = arith.select %29, %24, %30 : vector<8x32xi1>, vector<8x32xf32>
    %c0_20 = arith.constant 0 : index
    %c0_21 = arith.constant 0 : index
    %32 = vector.load %arg8[%c0_20, %c0_21] : memref<8x32xf32, #tpu.memory_space<vmem>>, vector<8x32xf32>
    tpu.vector_store %arg8[%c0_20, %c0_21], %31 {strides = array<i32>} : memref<8x32xf32, #tpu.memory_space<vmem>>, vector<8x32xf32>,
    return
  }
  func.func @transform_0(%arg0: i32) -> (i32, i32, i32) {
    %c0_i32 = arith.constant 0 : i32
    %c0_i32_0 = arith.constant 0 : i32
    %c0_i32_1 = arith.constant 0 : i32
    return %arg0, %c0_i32, %c0_i32_0 : i32, i32, i32
  }
  func.func @transform_1(%arg0: i32) -> (i32, i32, i32) {
    %c0_i32 = arith.constant 0 : i32
    %c0_i32_0 = arith.constant 0 : i32
    %c0_i32_1 = arith.constant 0 : i32
    return %arg0, %c0_i32, %c0_i32_0 : i32, i32, i32
  }
  func.func @transform_2(%arg0: i32) -> (i32, i32) {
    %c0_i32 = arith.constant 0 : i32
    %c0_i32_0 = arith.constant 0 : i32
    return %arg0, %c0_i32 : i32, i32
  }
  func.func @transform_3(%arg0: i32) -> (i32, i32) {
    %c0_i32 = arith.constant 0 : i32
    %c0_i32_0 = arith.constant 0 : i32
    %c0_i32_1 = arith.constant 0 : i32
    return %c0_i32, %c0_i32_0 : i32, i32
  }
  func.func @transform_4(%arg0: i32) -> (i32, i32) {
    %c0_i32 = arith.constant 0 : i32
    %c0_i32_0 = arith.constant 0 : i32
    %c0_i32_1 = arith.constant 0 : i32
    return %c0_i32, %c0_i32_0 : i32, i32
  }
  func.func @transform_5(%arg0: i32) -> (i32, i32) {
    %c0_i32 = arith.constant 0 : i32
    %c0_i32_0 = arith.constant 0 : i32
    %c0_i32_1 = arith.constant 0 : i32
    return %c0_i32, %c0_i32_0 : i32, i32
  }
  func.func @transform_6(%arg0: i32) -> (i32, i32) {
    %c0_i32 = arith.constant 0 : i32
    %c0_i32_0 = arith.constant 0 : i32
    %c0_i32_1 = arith.constant 0 : i32
    return %c0_i32, %c0_i32_0 : i32, i32
  }
  func.func @transform_7(%arg0: i32) -> (i32, i32) {
    %c0_i32 = arith.constant 0 : i32
    %c0_i32_0 = arith.constant 0 : i32
    return %arg0, %c0_i32 : i32, i32
  }
}

</mosaic_0001>

<llo_original>
// kernel: tpu_custom_call.1
$region0: #{tpu_custom_call.1}
  #allocation0 [shape = 'u32[]', space=smem, size = 0x4, offset = 0x4, fixed_abs, tag = 'smem constant byte address 0x4 - core index']
  #allocation1 [shape = 'u32[144,128]{1,0:T(1,128)}', space=vmem, size = 0x12000, scoped, tag = 'internal scratch']
  %s0 = inlined_call_operand.hbm [shape: f32[2,8,32], index: 0, kind: input, shape index: {}]
  %s1 = inlined_call_operand.vmem [shape: f32[2,4,8], index: 1, kind: input, shape index: {}]
  %s2 = inlined_call_operand.vmem [shape: f32[8,1], index: 2, kind: input, shape index: {}]
  %s3 = inlined_call_operand.hbm [shape: f32[32,32], index: 3, kind: input, shape index: {}]
  %s4 = inlined_call_operand.vmem [shape: f32[1,32], index: 4, kind: input, shape index: {}]
  %s5 = inlined_call_operand.hbm [shape: f32[32,32], index: 5, kind: input, shape index: {}]
  %s6 = inlined_call_operand.vmem [shape: f32[1,32], index: 6, kind: input, shape index: {}]
  %s7 = inlined_call_operand.hbm [shape: f32[8,32], index: 7, kind: output, shape index: {}]
  %s8 = sld [smem:[#allocation0]]
  $region50: #{tpu_custom_call.1} parent=0
    _
  %s10 = ssub.s32 1, %s8
  %s11 = scalar_select 0, %s10, %s8
  $region1: #{tpu_custom_call.1} parent=0
    #allocation2 [shape = 'u8[8192]{0}', space=vmem, size = 0x2000, scoped, tag = 'input window, operand 0, single buffered']
    #allocation3 [shape = 's32[1]{0}', space=sflag, size = 0x4, scoped, tag = 'scoped memory for tpu_custom_call.1']
    #allocation4 [shape = 's32[1]{0}', space=sflag, size = 0x4, scoped, tag = 'scoped memory for tpu_custom_call.1']
    #allocation5 [shape = 'u8[16384]{0}', space=vmem, size = 0x4000, scoped, tag = 'input window, operand 3, single buffered']
    #allocation6 [shape = 's32[1]{0}', space=sflag, size = 0x4, scoped, tag = 'scoped memory for tpu_custom_call.1']
    #allocation7 [shape = 'u8[16384]{0}', space=vmem, size = 0x4000, scoped, tag = 'input window, operand 5, single buffered']
    #allocation8 [shape = 'u8[4096]{0}', space=vmem, size = 0x1000, scoped, tag = 'output window, operand 0, single buffered']
    %12 = vsyncpa [#allocation3], 0
    %13 = vsyncpa [#allocation6], 0
    %14 = vsyncpa [#allocation4], 0
    // Predicated region
    $region2: #{tpu_custom_call.1} parent=1 // pred_check
      _
    $region3: #{tpu_custom_call.1} parent=1 // pred_check_branch
      %16 = sbr.rel (0) target = $region5
    $region4: #{tpu_custom_call.1} parent=1 // pred_region
      %s18 = ssub.s32 256, 256
      %19 = vsyncadd [#allocation3], %s18
      %s20 = sshll.u32 [#allocation2], 4
      %s21 = int_to_ptr.vmem [resolvable:$true] %s20
      %26 = dma.hbm_to_vmem [thread:$0]  %s0, 256, %s21, [#allocation3], 128, 128, 8
    $region5: #{tpu_custom_call.1} parent=1 // pred_fallthru
      _
    // Predicated region
    $region6: #{tpu_custom_call.1} parent=1 // pred_check
      _
    $region7: #{tpu_custom_call.1} parent=1 // pred_check_branch
      %28 = sbr.rel (0) target = $region9
    $region8: #{tpu_custom_call.1} parent=1 // pred_region
      _
    $region9: #{tpu_custom_call.1} parent=1 // pred_fallthru
      _
    // Predicated region
    $region10: #{tpu_custom_call.1} parent=1 // pred_check
      _
    $region11: #{tpu_custom_call.1} parent=1 // pred_check_branch
      %30 = sbr.rel (0) target = $region13
    $region12: #{tpu_custom_call.1} parent=1 // pred_region
      _
    $region13: #{tpu_custom_call.1} parent=1 // pred_fallthru
      _
    // Predicated region
    $region14: #{tpu_custom_call.1} parent=1 // pred_check
      _
    $region15: #{tpu_custom_call.1} parent=1 // pred_check_branch
      %32 = sbr.rel (0) target = $region17
    $region16: #{tpu_custom_call.1} parent=1 // pred_region
      %s34 = ssub.s32 512, 512
      %35 = vsyncadd [#allocation6], %s34
      %s36 = sshll.u32 [#allocation5], 4
      %s37 = int_to_ptr.vmem [resolvable:$true] %s36
      %42 = dma.hbm_to_vmem [thread:$0]  %s3, 512, %s37, [#allocation6], 128, 128, 8
    $region17: #{tpu_custom_call.1} parent=1 // pred_fallthru
      _
    // Predicated region
    $region18: #{tpu_custom_call.1} parent=1 // pred_check
      _
    $region19: #{tpu_custom_call.1} parent=1 // pred_check_branch
      %44 = sbr.rel (0) target = $region21
    $region20: #{tpu_custom_call.1} parent=1 // pred_region
      _
    $region21: #{tpu_custom_call.1} parent=1 // pred_fallthru
      _
    // Predicated region
    $region22: #{tpu_custom_call.1} parent=1 // pred_check
      _
    $region23: #{tpu_custom_call.1} parent=1 // pred_check_branch
      %46 = sbr.rel (0) target = $region25
    $region24: #{tpu_custom_call.1} parent=1 // pred_region
      %s48 = ssub.s32 512, 512
      %49 = vsyncadd [#allocation6], %s48
      %s50 = sshll.u32 [#allocation7], 4
      %s51 = int_to_ptr.vmem [resolvable:$true] %s50
      %56 = dma.hbm_to_vmem [thread:$0]  %s5, 512, %s51, [#allocation6], 128, 128, 8
    $region25: #{tpu_custom_call.1} parent=1 // pred_fallthru
      _
    // Predicated region
    $region26: #{tpu_custom_call.1} parent=1 // pred_check
      _
    $region27: #{tpu_custom_call.1} parent=1 // pred_check_branch
      %58 = sbr.rel (0) target = $region29
    $region28: #{tpu_custom_call.1} parent=1 // pred_region
      _
    $region29: #{tpu_custom_call.1} parent=1 // pred_fallthru
      _
    // Predicated region
    $region30: #{tpu_custom_call.1} parent=1 // pred_check
      _
    $region31: #{tpu_custom_call.1} parent=1 // pred_check_branch
      %60 = sbr.rel (0) target = $region33
    $region32: #{tpu_custom_call.1} parent=1 // pred_region
      %61 = dma.done [#allocation3], 256
    $region33: #{tpu_custom_call.1} parent=1 // pred_fallthru
      _
    // Predicated region
    $region34: #{tpu_custom_call.1} parent=1 // pred_check
      _
    $region35: #{tpu_custom_call.1} parent=1 // pred_check_branch
      %63 = sbr.rel (0) target = $region37
    $region36: #{tpu_custom_call.1} parent=1 // pred_region
      %64 = dma.done [#allocation6], 512
    $region37: #{tpu_custom_call.1} parent=1 // pred_fallthru
      _
    // Predicated region
    $region38: #{tpu_custom_call.1} parent=1 // pred_check
      _
    $region39: #{tpu_custom_call.1} parent=1 // pred_check_branch
      %66 = sbr.rel (0) target = $region41
    $region40: #{tpu_custom_call.1} parent=1 // pred_region
      %67 = dma.done [#allocation6], 512
    $region41: #{tpu_custom_call.1} parent=1 // pred_fallthru
      _
    %v68 = vld [vmem:[#allocation2] sm:$0xff]
    %v69 = vld [vmem:[#allocation2 + $0x8] sm:$0xff]
    %v70 = vld [vmem:[#allocation5] sm:$0xff]
    %v71 = vld [vmem:[#allocation5 + $0x8] sm:$0xff]
    %v72 = vld [vmem:[#allocation5 + $0x10] sm:$0xff]
    %v73 = vld [vmem:[#allocation5 + $0x18] sm:$0xff]
    %v74 = vld [vmem:[%s4] sm:$0x1]
    %v76 = vlaneseq
    %v77 = vshrl.u32 %v76, 7
    %v78 = vsub.s32 0, %v77
    %v79 = vrot.slane %v74, %v78
    %vm81 = vcmask 261120
    %v83 = vsel %vm81, %v68, 0
    %v86 = vsel %vm81, %v69, 0
    %88 = vmatprep.subr.mxu0 0.0
    %89 = vmatpush1.msra.mxu0 %v70
    %90 = vmatprep.subr.mxu0 0.0
    %91 = vmatpush1.msra.mxu0 %v71
    %92 = vmatprep.subr.mxu0 0.0
    %93 = vmatpush1.msra.mxu0 %v72
    %94 = vmatprep.subr.mxu0 0.0
    %95 = vmatpush1.msra.mxu0 %v73
    %96 = vmatprep.subr.mxu0 0.0
    %97 = vmatpush1.msra.mxu0 0.0
    %98 = vmatprep.subr.mxu0 0.0
    %99 = vmatpush1.msra.mxu0 0.0
    %100 = vmatprep.subr.mxu0 0.0
    %101 = vmatpush1.msra.mxu0 0.0
    %102 = vmatprep.subr.mxu0 0.0
    %103 = vmatpush1.msra.mxu0 0.0
    %104 = vmatprep.subr.mxu0 0.0
    %105 = vmatpush1.msra.mxu0 0.0
    %106 = vmatprep.subr.mxu0 0.0
    %107 = vmatpush1.msra.mxu0 0.0
    %108 = vmatprep.subr.mxu0 0.0
    %109 = vmatpush1.msra.mxu0 0.0
    %110 = vmatprep.subr.mxu0 0.0
    %111 = vmatpush1.msra.mxu0 0.0
    %112 = vmatprep.subr.mxu0 0.0
    %113 = vmatpush1.msra.mxu0 0.0
    %114 = vmatprep.subr.mxu0 0.0
    %115 = vmatpush1.msra.mxu0 0.0
    %116 = vmatprep.subr.mxu0 0.0
    %117 = vmatpush1.msra.mxu0 0.0
    %118 = vmatprep.subr.mxu0 0.0
    %119 = vmatpush1.msra.mxu0 0.0
    %120 = vmatprep.subr.mxu0 0.0
    %121 = vmatpush1.msra.mxu0 0.0
    %122 = vmatprep.subr.mxu0 0.0
    %123 = vmatpush1.msra.mxu0 0.0
    %124 = vmatprep.subr.mxu0 0.0
    %125 = vmatpush1.msra.mxu0 0.0
    %126 = vmatprep.subr.mxu0 0.0
    %127 = vmatpush1.msra.mxu0 0.0
    %128 = vmatprep.subr.mxu0 0.0
    %129 = vmatpush1.msra.mxu0 0.0
    %130 = vmatprep.subr.mxu0 0.0
    %131 = vmatpush1.msra.mxu0 0.0
    %132 = vmatprep.subr.mxu0 0.0
    %133 = vmatpush1.msra.mxu0 0.0
    %134 = vmatprep.subr.mxu0 0.0
    %135 = vmatpush1.msra.mxu0 0.0
    %136 = vmatprep.subr.mxu0 0.0
    %137 = vmatpush1.msra.mxu0 0.0
    %138 = vmatprep.subr.mxu0 0.0
    %139 = vmatpush1.msra.mxu0 0.0
    %140 = vmatprep.subr.mxu0 0.0
    %141 = vmatpush1.msra.mxu0 0.0
    %142 = vmatprep.subr.mxu0 0.0
    %143 = vmatpush1.msra.mxu0 0.0
    %144 = vmatprep.subr.mxu0 0.0
    %145 = vmatpush1.msra.mxu0 0.0
    %146 = vmatprep.subr.mxu0 0.0
    %147 = vmatpush1.msra.mxu0 0.0
    %148 = vmatprep.subr.mxu0 0.0
    %149 = vmatpush1.msra.mxu0 0.0
    %150 = vmatprep.subr.mxu0 0.0
    %151 = vmatpush1.msra.mxu0 0.0
    %152 = vmatprep.mubr.f32.mxu0 0.0
    %153 = vmatmul.mubr.f32.gmra.mrb[0].mxu0 %v83
    %v154 = vpop.f32.mrb[0].mxu0
    %v155 = vadd.f32 %v79, %v154
    %v156 = vpop.f32.mrb[0].mxu0
    %157 = vmatprep.mubr.f32.mxu0 0.0
    %158 = vmatmul.mubr.f32.gmra.mrb[0].mxu0 %v86
    %v159 = vpop.f32.mrb[0].mxu0
    %v160 = vadd.f32 %v79, %v159
    %v161 = vpop.f32.mrb[0].mxu0
    %162 = vdwg.mxu0
    %v163 = vld [vmem:[%s1] sm:$0xf]
    %v164 = vld [vmem:[%s1 + $0x4] sm:$0xf]
    %vm165 = vcmp.eq.f32.partialorder %v163, 0.0
    %vm166 = vcmp.eq.f32.partialorder %v164, 0.0
    %v167 = vsel %vm165, 1, 0
    %v168 = vsel %vm166, 1, 0
    %v169 = vcvt.s32.f32 %v167
    %v170 = vcvt.s32.f32 %v168
    %v171 = vlaneseq
    %v172 = vshrl.u32 %v171, 7
    %v173 = vsub.s32 0, %v172
    %v174 = vrot.slane %v169, %v173
    %176 = vbcast.lane.b32.xlu0 %v174, 256
    %v177 = vpop.permute.xlu0 %176
    %v178 = vlaneseq
    %v179 = vshrl.u32 %v178, 7
    %v180 = vsub.s32 1, %v179
    %v181 = vrot.slane %v169, %v180
    %183 = vbcast.lane.b32.xlu0 %v181, 256
    %v184 = vpop.permute.xlu0 %183
    %v185 = vlaneseq
    %v186 = vshrl.u32 %v185, 7
    %v187 = vsub.s32 2, %v186
    %v188 = vrot.slane %v169, %v187
    %190 = vbcast.lane.b32.xlu0 %v188, 256
    %v191 = vpop.permute.xlu0 %190
    %v192 = vlaneseq
    %v193 = vshrl.u32 %v192, 7
    %v194 = vsub.s32 3, %v193
    %v195 = vrot.slane %v169, %v194
    %197 = vbcast.lane.b32.xlu0 %v195, 256
    %v198 = vpop.permute.xlu0 %197
    %v199 = vlaneseq
    %v200 = vshrl.u32 %v199, 7
    %v201 = vsub.s32 0, %v200
    %v202 = vrot.slane %v170, %v201
    %204 = vbcast.lane.b32.xlu0 %v202, 256
    %v205 = vpop.permute.xlu0 %204
    %v206 = vlaneseq
    %v207 = vshrl.u32 %v206, 7
    %v208 = vsub.s32 1, %v207
    %v209 = vrot.slane %v170, %v208
    %211 = vbcast.lane.b32.xlu0 %v209, 256
    %v212 = vpop.permute.xlu0 %211
    %v213 = vlaneseq
    %v214 = vshrl.u32 %v213, 7
    %v215 = vsub.s32 2, %v214
    %v216 = vrot.slane %v170, %v215
    %218 = vbcast.lane.b32.xlu0 %v216, 256
    %v219 = vpop.permute.xlu0 %218
    %v220 = vlaneseq
    %v221 = vshrl.u32 %v220, 7
    %v222 = vsub.s32 3, %v221
    %v223 = vrot.slane %v170, %v222
    %225 = vbcast.lane.b32.xlu0 %v223, 256
    %v226 = vpop.permute.xlu0 %225
    %v227 = vmul.f32 %v155, %v177
    %v228 = vmul.f32 %v155, %v184
    %v229 = vmul.f32 %v155, %v191
    %v230 = vmul.f32 %v155, %v198
    %v231 = vmul.f32 %v160, %v205
    %v232 = vmul.f32 %v160, %v212
    %v233 = vmul.f32 %v160, %v219
    %v234 = vmul.f32 %v160, %v226
    %v235 = vsel %vm81, %v227, -inf
    %v236 = vrot.slane %v235, 4
    %v237 = vmax.f32 %v235, %v236
    %v238 = vrot.slane %v237, 2
    %v239 = vmax.f32 %v237, %v238
    %v240 = vrot.slane %v239, 1
    %v241 = vmax.f32 %v239, %v240
    %v242 = vsel %vm81, %v228, -inf
    %v243 = vrot.slane %v242, 4
    %v244 = vmax.f32 %v242, %v243
    %v245 = vrot.slane %v244, 2
    %v246 = vmax.f32 %v244, %v245
    %v247 = vrot.slane %v246, 1
    %v248 = vmax.f32 %v246, %v247
    %v249 = vsel %vm81, %v229, -inf
    %v250 = vrot.slane %v249, 4
    %v251 = vmax.f32 %v249, %v250
    %v252 = vrot.slane %v251, 2
    %v253 = vmax.f32 %v251, %v252
    %v254 = vrot.slane %v253, 1
    %v255 = vmax.f32 %v253, %v254
    %v256 = vsel %vm81, %v230, -inf
    %v257 = vrot.slane %v256, 4
    %v258 = vmax.f32 %v256, %v257
    %v259 = vrot.slane %v258, 2
    %v260 = vmax.f32 %v258, %v259
    %v261 = vrot.slane %v260, 1
    %v262 = vmax.f32 %v260, %v261
    %v263 = vsel %vm81, %v231, -inf
    %v264 = vrot.slane %v263, 4
    %v265 = vmax.f32 %v263, %v264
    %v266 = vrot.slane %v265, 2
    %v267 = vmax.f32 %v265, %v266
    %v268 = vrot.slane %v267, 1
    %v269 = vmax.f32 %v267, %v268
    %v270 = vsel %vm81, %v232, -inf
    %v271 = vrot.slane %v270, 4
    %v272 = vmax.f32 %v270, %v271
    %v273 = vrot.slane %v272, 2
    %v274 = vmax.f32 %v272, %v273
    %v275 = vrot.slane %v274, 1
    %v276 = vmax.f32 %v274, %v275
    %v277 = vsel %vm81, %v233, -inf
    %v278 = vrot.slane %v277, 4
    %v279 = vmax.f32 %v277, %v278
    %v280 = vrot.slane %v279, 2
    %v281 = vmax.f32 %v279, %v280
    %v282 = vrot.slane %v281, 1
    %v283 = vmax.f32 %v281, %v282
    %v284 = vsel %vm81, %v234, -inf
    %v285 = vrot.slane %v284, 4
    %v286 = vmax.f32 %v284, %v285
    %v287 = vrot.slane %v286, 2
    %v288 = vmax.f32 %v286, %v287
    %v289 = vrot.slane %v288, 1
    %v290 = vmax.f32 %v288, %v289
    %v291 = vld [vmem:[#allocation7] sm:$0xff]
    %v292 = vld [vmem:[#allocation7 + $0x8] sm:$0xff]
    %v293 = vld [vmem:[#allocation7 + $0x10] sm:$0xff]
    %v294 = vld [vmem:[#allocation7 + $0x18] sm:$0xff]
    %v295 = vld [vmem:[%s6] sm:$0x1]
    %v297 = vlaneseq
    %v298 = vshrl.u32 %v297, 7
    %v299 = vsub.s32 0, %v298
    %v300 = vrot.slane %v295, %v299
    %vm310 = vcmask 1041409
    %v311 = vsel %vm310, %v248, %v241
    %vm312 = vcmask 1042434
    %v313 = vsel %vm312, %v255, %v311
    %vm314 = vcmask 1043459
    %v315 = vsel %vm314, %v262, %v313
    %vm316 = vcmask 1044484
    %v317 = vsel %vm316, %v269, %v315
    %vm318 = vcmask 1045509
    %v319 = vsel %vm318, %v276, %v317
    %vm320 = vcmask 1046534
    %v321 = vsel %vm320, %v283, %v319
    %vm322 = vcmask 1047559
    %v323 = vsel %vm322, %v290, %v321
    %v324 = vsel %vm81, %v323, 0
    %326 = vmatprep.subr.mxu0 0.0
    %327 = vmatpush1.msra.mxu0 %v291
    %328 = vmatprep.subr.mxu0 0.0
    %329 = vmatpush1.msra.mxu0 %v292
    %330 = vmatprep.subr.mxu0 0.0
    %331 = vmatpush1.msra.mxu0 %v293
    %332 = vmatprep.subr.mxu0 0.0
    %333 = vmatpush1.msra.mxu0 %v294
    %334 = vmatprep.subr.mxu0 0.0
    %335 = vmatpush1.msra.mxu0 0.0
    %336 = vmatprep.subr.mxu0 0.0
    %337 = vmatpush1.msra.mxu0 0.0
    %338 = vmatprep.subr.mxu0 0.0
    %339 = vmatpush1.msra.mxu0 0.0
    %340 = vmatprep.subr.mxu0 0.0
    %341 = vmatpush1.msra.mxu0 0.0
    %342 = vmatprep.subr.mxu0 0.0
    %343 = vmatpush1.msra.mxu0 0.0
    %344 = vmatprep.subr.mxu0 0.0
    %345 = vmatpush1.msra.mxu0 0.0
    %346 = vmatprep.subr.mxu0 0.0
    %347 = vmatpush1.msra.mxu0 0.0
    %348 = vmatprep.subr.mxu0 0.0
    %349 = vmatpush1.msra.mxu0 0.0
    %350 = vmatprep.subr.mxu0 0.0
    %351 = vmatpush1.msra.mxu0 0.0
    %352 = vmatprep.subr.mxu0 0.0
    %353 = vmatpush1.msra.mxu0 0.0
    %354 = vmatprep.subr.mxu0 0.0
    %355 = vmatpush1.msra.mxu0 0.0
    %356 = vmatprep.subr.mxu0 0.0
    %357 = vmatpush1.msra.mxu0 0.0
    %358 = vmatprep.subr.mxu0 0.0
    %359 = vmatpush1.msra.mxu0 0.0
    %360 = vmatprep.subr.mxu0 0.0
    %361 = vmatpush1.msra.mxu0 0.0
    %362 = vmatprep.subr.mxu0 0.0
    %363 = vmatpush1.msra.mxu0 0.0
    %364 = vmatprep.subr.mxu0 0.0
    %365 = vmatpush1.msra.mxu0 0.0
    %366 = vmatprep.subr.mxu0 0.0
    %367 = vmatpush1.msra.mxu0 0.0
    %368 = vmatprep.subr.mxu0 0.0
    %369 = vmatpush1.msra.mxu0 0.0
    %370 = vmatprep.subr.mxu0 0.0
    %371 = vmatpush1.msra.mxu0 0.0
    %372 = vmatprep.subr.mxu0 0.0
    %373 = vmatpush1.msra.mxu0 0.0
    %374 = vmatprep.subr.mxu0 0.0
    %375 = vmatpush1.msra.mxu0 0.0
    %376 = vmatprep.subr.mxu0 0.0
    %377 = vmatpush1.msra.mxu0 0.0
    %378 = vmatprep.subr.mxu0 0.0
    %379 = vmatpush1.msra.mxu0 0.0
    %380 = vmatprep.subr.mxu0 0.0
    %381 = vmatpush1.msra.mxu0 0.0
    %382 = vmatprep.subr.mxu0 0.0
    %383 = vmatpush1.msra.mxu0 0.0
    %384 = vmatprep.subr.mxu0 0.0
    %385 = vmatpush1.msra.mxu0 0.0
    %386 = vmatprep.subr.mxu0 0.0
    %387 = vmatpush1.msra.mxu0 0.0
    %388 = vmatprep.subr.mxu0 0.0
    %389 = vmatpush1.msra.mxu0 0.0
    %390 = vmatprep.mubr.f32.mxu0 0.0
    %391 = vmatmul.mubr.f32.gmra.mrb[0].mxu0 %v324
    %v392 = vpop.f32.mrb[0].mxu0
    %v393 = vadd.f32 %v300, %v392
    %v394 = vpop.f32.mrb[0].mxu0
    %395 = vdwg.mxu0
    %v396 = vld [vmem:[%s2] sm:$0xff]
    %vm397 = vcmp.eq.f32.partialorder %v396, 0.0
    %v398 = vsel %vm397, 1, 0
    %399 = vset.pattern.permute.xlu0 0
    %400 = vperm.xlu0 %399, %v398
    %v401 = vpop.permute.xlu0 %400
    %vm402 = vcmp.eq.s32.totalorder %v401, 1
    %v403 = vsel %vm402, %v393, 0.0
    %404 = vst.msk [vmem:[#allocation8] sm:$0xff] %vm81, %v403
    // Predicated region
    $region42: #{tpu_custom_call.1} parent=1 // pred_check
      _
    $region43: #{tpu_custom_call.1} parent=1 // pred_check_branch
      %406 = sbr.rel (0) target = $region45
    $region44: #{tpu_custom_call.1} parent=1 // pred_region
      %s408 = ssub.s32 128, 128
      %409 = vsyncadd [#allocation4], %s408
      %s411 = sshll.u32 [#allocation8], 4
      %s412 = int_to_ptr.vmem [resolvable:$true] %s411
      %414 = dma.vmem_to_hbm [thread:$0]  %s412, 128, %s7, [#allocation4]
    $region45: #{tpu_custom_call.1} parent=1 // pred_fallthru
      _
    // Predicated region
    $region46: #{tpu_custom_call.1} parent=1 // pred_check
      _
    $region47: #{tpu_custom_call.1} parent=1 // pred_check_branch
      %416 = sbr.rel (0) target = $region49
    $region48: #{tpu_custom_call.1} parent=1 // pred_region
      %417 = dma.done [#allocation4], 128
    $region49: #{tpu_custom_call.1} parent=1 // pred_fallthru
      _
    %418 = vsyncpa [#allocation3], 1
    %419 = vsyncpa [#allocation6], 1
    %420 = vsyncpa [#allocation4], 1

</llo_original>
